<compile_context>
chip_gen: v7x
topology: tpu7x:2x2x1
jax: 0.10.0
libtpu: 0.0.40
codegen_flags: <defaults>
</compile_context>

<pallas_src>
import jax
import jax.numpy as jnp
import numpy as np
from jax.experimental import pallas as pl
from jax.experimental.pallas import tpu as pltpu


def _round_up(a, m):
    return ((a + m - 1) // m) * m


def make_fitting_kernel(network_size, use_bias, use_resnet_dt, final_as_row,
                        compute_dtype=jnp.bfloat16):
    """Fused-MLP kernel body operating on lane-packed tiles.

    final_as_row=True (only when p*d_out == 1) means the last weight is passed
    pre-reshaped to (1, d_prev) and the final layer is a VPU multiply + lane
    reduction instead of an N=1 MXU matmul."""
    L = len(network_size)

    def kernel(*refs):
        x_ref = refs[0]
        out_ref = refs[-1]
        p = refs[1:-1]

        idx = 0
        x_raw = x_ref[...]                      # (tm_p, p*d_in), native dtype
        xin = x_raw.astype(compute_dtype)       # cast in-kernel (no HBM copy)
        acc = None                              # running activation, float32

        # Hidden layers (block-diagonal packed weights, bf16 on the MXU).
        for i in range(1, L - 1):
            w = p[idx][...]
            idx += 1
            lhs = xin if i == 1 else acc.astype(w.dtype)
            h = jnp.dot(lhs, w, preferred_element_type=jnp.float32)
            if use_bias:
                h = h + p[idx][...].astype(jnp.float32)
                idx += 1
            h = jnp.tanh(h)                     # f32 tanh on the EUP
            if i > 1:
                if network_size[i] == network_size[i - 1] and use_resnet_dt:
                    rdt = p[idx][...].astype(jnp.float32)
                    idx += 1
                    acc = h * rdt + acc
                else:
                    acc = h + acc
            else:
                acc = h

        if acc is None:                         # degenerate: no hidden layers
            acc = x_raw.astype(jnp.float32)

        # Final (linear) layer.
        if final_as_row:
            # p*d_out == 1: VPU broadcast-multiply + lane reduction, no MXU.
            wrow = p[idx][...].astype(jnp.float32)              # (1, d_prev)
            idx += 1
            y = jnp.sum(acc * wrow, axis=-1, keepdims=True)     # (tm_p, 1)
        else:
            w = p[idx][...]                                     # block-diag
            idx += 1
            y = jnp.dot(acc.astype(w.dtype), w,
                        preferred_element_type=jnp.float32)     # (tm_p, p*dout)
        if use_bias:
            y = y + p[idx][...].astype(jnp.float32)
            idx += 1

        out_ref[...] = y.astype(out_ref.dtype)

    return kernel


def _prepare_params(params, network_size, use_bias, use_resnet_dt, p,
                    stream_dtype, final_as_row):
    """Pack params for the kernel: every weight -> blockdiag(W x p) in
    stream_dtype (bf16); biases / resnet_dt tiled p times along features,
    kept f32.  If final_as_row (p*d_out == 1), the last weight becomes a
    (1, d_prev) f32 row instead."""
    L = len(network_size)
    eye = jnp.eye(p, dtype=jnp.float32)

    def blockdiag(w):
        return jnp.kron(eye, w)                # (p*din, p*dout)

    def tilefeat(v):
        return jnp.tile(v, (1, p))             # (1, p*n)

    prepared = []
    idx = 0
    for i in range(1, L - 1):
        prepared.append(blockdiag(params[idx]).astype(stream_dtype)); idx += 1
        if use_bias:
            prepared.append(tilefeat(params[idx]).astype(jnp.float32)); idx += 1
        if i > 1 and network_size[i] == network_size[i - 1] and use_resnet_dt:
            prepared.append(tilefeat(params[idx]).astype(jnp.float32)); idx += 1
    w_last = params[idx]; idx += 1
    if final_as_row:
        prepared.append(w_last.reshape(1, -1).astype(jnp.float32))
    else:
        prepared.append(blockdiag(w_last).astype(stream_dtype))
    if use_bias:
        prepared.append(tilefeat(params[idx]).astype(jnp.float32)); idx += 1
    return prepared


def _device_kind():
    try:
        return jax.devices()[0].device_kind.lower()
    except Exception:
        return ""


def fitting_net_forward(x, params, network_size, use_bias, use_resnet_dt,
                        *, tm=8192, stream_dtype=jnp.bfloat16, packing=None):
    """x: (B, D_in).  params: flat float32 list in forward-consumption order.

    tm is the row tile in ORIGINAL batch rows (8-16K recommended for large B)."""
    B, d_in = x.shape
    assert d_in == network_size[0]
    d_out = network_size[-1]
    out_dtype = x.dtype
    kind = _device_kind()

    # Packing factor: fill the MXU / lane width.  128-wide MXUs (v3/v4/v5*)
    # saturate at p=2; v6e/v7x (256-wide) at p=4.  Must divide B (the reshape
    # (B, d_in) -> (B/p, p*d_in) is a free contiguous view only then).
    if packing is None:
        pmax = 2 if any(g in kind for g in ("v3", "v4", "v5")) else 4
        p = next((q for q in (4, 2, 1) if q <= pmax and B % q == 0), 1)
    else:
        p = int(packing)
        assert B % p == 0, "packing factor must divide the batch"

    Bp = B // p
    d_in_p = p * d_in
    d_out_p = p * d_out
    final_as_row = (d_out_p == 1)

    # Row-tile selection (in packed rows).  Large tiles amortize the ~0.35us
    # per-grid-step overhead; clamp to the batch so small batches don't pad.
    tm_p = max(8, int(tm) // p)
    tm_p = min(tm_p, _round_up(Bp, 8))
    tm_p = _round_up(tm_p, 8)
    num_tiles = pl.cdiv(Bp, tm_p)
    # v7x: the "parallel" axis is sharded across 2 TensorCores -- want >=4
    # steps for large batches so neither TC idles.
    if "v7" in kind and num_tiles < 4 and Bp >= 4 * 512:
        tm_p = max(8, _round_up(pl.cdiv(Bp, 4), 8))
        num_tiles = pl.cdiv(Bp, tm_p)
    # Even step count keeps per-TC pipelining balanced (harmless elsewhere).
    if num_tiles > 1 and num_tiles % 2 == 1:
        tm_p = max(8, _round_up(pl.cdiv(Bp, num_tiles + 1), 8))
        num_tiles = pl.cdiv(Bp, tm_p)

    # Free contiguous view; no pad, no dtype copy (kernel casts to bf16).
    xp = x.reshape(Bp, d_in_p)

    prepared = _prepare_params(params, network_size, use_bias, use_resnet_dt,
                               p, stream_dtype, final_as_row)
    kernel = make_fitting_kernel(network_size, use_bias, use_resnet_dt,
                                 final_as_row, compute_dtype=stream_dtype)

    in_specs = [pl.BlockSpec((tm_p, d_in_p), lambda i: (i, 0))]
    for prm in prepared:
        # Full-array blocks; block index is constant -> fetched into VMEM once.
        in_specs.append(pl.BlockSpec(prm.shape, lambda i: (0, 0)))
    out_spec = pl.BlockSpec((tm_p, d_out_p), lambda i: (i, 0))

    # Rough VMEM footprint; only raise the scoped limit when actually needed
    # (stays under the 16 MiB v5e default at the default tm).
    max_h = max(network_size[1:-1] or [network_size[0]])
    est = (3 * tm_p * p * max_h * 4                     # f32 activations
           + 2 * tm_p * d_in_p * x.dtype.itemsize       # x double buffer
           + 2 * tm_p * d_out_p * jnp.dtype(out_dtype).itemsize
           + 2 * sum(int(np.prod(q.shape)) * q.dtype.itemsize for q in prepared))
    vmem_limit = None
    if est > 12 * 1024 * 1024:
        vmem_limit = min(int(est * 1.5), 56 * 1024 * 1024)

    out = pl.pallas_call(
        kernel,
        out_shape=jax.ShapeDtypeStruct((Bp, d_out_p), out_dtype),
        grid_spec=pltpu.PrefetchScalarGridSpec(
            num_scalar_prefetch=0,
            grid=(num_tiles,),
            in_specs=in_specs,
            out_specs=out_spec,
        ),
        compiler_params=pltpu.CompilerParams(
            dimension_semantics=("parallel",),
            vmem_limit_bytes=vmem_limit,
        ),
    )(xp, *prepared)

    return out.reshape(B, d_out)                # free contiguous view


def init_params(key, network_size, ener_shift, use_bias, use_resnet_dt):
    """Deterministic synthetic init mirroring the PyTorch __init__ distributions."""
    params = []
    L = len(network_size)
    for i in range(1, L - 1):
        n_in, n_out = network_size[i - 1], network_size[i]
        key, k_w, k_b, k_r = jax.random.split(key, 4)
        std = 1.0 / np.sqrt(n_in + n_out)
        params.append(jax.random.normal(k_w, (n_in, n_out), jnp.float32) * std)
        if use_bias:
            params.append(jax.random.normal(k_b, (1, n_out), jnp.float32) * 1.0)
        if i > 1 and network_size[i] == network_size[i - 1] and use_resnet_dt:
            params.append(0.1 + 0.001 * jax.random.normal(k_r, (1, n_out), jnp.float32))
    # Final layer.
    n_in, n_out = network_size[L - 2], network_size[L - 1]
    key, k_w, k_b = jax.random.split(key, 3)
    std = 1.0 / np.sqrt(n_in + n_out)
    params.append(jax.random.normal(k_w, (n_in, n_out), jnp.float32) * std)
    if use_bias:
        params.append(ener_shift + 1.0 * jax.random.normal(k_b, (1, n_out), jnp.float32))
    return params


def fitting_net_reference(x, params, network_size, use_bias, use_resnet_dt):
    """Pure-JAX f32 reference of the PyTorch forward."""
    idx = 0
    for i in range(1, len(network_size) - 1):
        h = x @ params[idx]
        idx += 1
        if use_bias:
            h = h + params[idx]
            idx += 1
        h = jnp.tanh(h)
        if i > 1:
            if network_size[i] == network_size[i - 1] and use_resnet_dt:
                x = h * params[idx] + x
                idx += 1
            else:
                x = h + x
        else:
            x = h
    y = x @ params[idx]
    idx += 1
    if use_bias:
        y = y + params[idx]
        idx += 1
    return y


if __name__ == "__main__":
    # cfg = {'bias': True, 'resnet_dt': True, 'activation': 'tanh',
    #        'network_size': [64, 64, 1]}, input_dim = 32, ener_shift = -3.5
    input_dim = 32
    network_size = [input_dim, 64, 64, 1]
    use_bias = True
    use_resnet_dt = True
    ener_shift = -3.5

    key = jax.random.PRNGKey(0)
    key, kx = jax.random.split(key)
    B = 600  # NOT a multiple of the row tile -> exercises the masked last tile
    x = jax.random.normal(kx, (B, input_dim), jnp.float32)

    params = init_params(key, network_size, ener_shift, use_bias, use_resnet_dt)
    ref = fitting_net_reference(x, params, network_size, use_bias, use_resnet_dt)

    # Small explicit tm so the demo grid has several (even) steps plus a
    # partial edge tile; production callers should keep the default tm=8192.
    out = fitting_net_forward(x, params, network_size, use_bias, use_resnet_dt,
                              tm=256)
    out = jax.block_until_ready(out)
    assert out.shape == (B, network_size[-1])
    # bf16 x / weight stream (f32 accumulation) -> loosened tolerance vs f32 ref.
    np.testing.assert_allclose(np.asarray(out), np.asarray(ref), rtol=3e-2, atol=3e-2)

    # Also exercise the default (single large tile) path.
    out2 = jax.block_until_ready(
        fitting_net_forward(x, params, network_size, use_bias, use_resnet_dt))
    np.testing.assert_allclose(np.asarray(out2), np.asarray(ref), rtol=3e-2, atol=3e-2)

    print("KERNEL_OK")
</pallas_src>

<mosaic_0001>
module attributes {stable_mosaic.version = 11 : i64} {
  func.func @kernel(%arg0: i32, %arg1: memref<40x128xf32, #tpu.memory_space<vmem>>, %arg2: memref<128x256xbf16, #tpu.memory_space<vmem>>, %arg3: memref<1x256xf32, #tpu.memory_space<vmem>>, %arg4: memref<256x256xbf16, #tpu.memory_space<vmem>>, %arg5: memref<1x256xf32, #tpu.memory_space<vmem>>, %arg6: memref<1x256xf32, #tpu.memory_space<vmem>>, %arg7: memref<256x4xbf16, #tpu.memory_space<vmem>>, %arg8: memref<1x4xf32, #tpu.memory_space<vmem>>, %arg9: memref<40x4xf32, #tpu.memory_space<vmem>>) attributes {dimension_semantics = [#tpu.dimension_semantics<parallel>], iteration_bounds = array<i64: 4>, scalar_prefetch = 0 : i64, scratch_operands = 0 : i64, tpu.core_type = #tpu.core_type<tc>, window_params = [{transform_indices = @transform_0, window_bounds = array<i64: 40, 128>}, {pipeline_mode = #tpu.pipeline_mode<synchronous>, transform_indices = @transform_1, window_bounds = array<i64: 128, 256>}, {pipeline_mode = #tpu.pipeline_mode<synchronous>, transform_indices = @transform_2, window_bounds = array<i64: 1, 256>}, {pipeline_mode = #tpu.pipeline_mode<synchronous>, transform_indices = @transform_3, window_bounds = array<i64: 256, 256>}, {pipeline_mode = #tpu.pipeline_mode<synchronous>, transform_indices = @transform_4, window_bounds = array<i64: 1, 256>}, {pipeline_mode = #tpu.pipeline_mode<synchronous>, transform_indices = @transform_5, window_bounds = array<i64: 1, 256>}, {pipeline_mode = #tpu.pipeline_mode<synchronous>, transform_indices = @transform_6, window_bounds = array<i64: 256, 4>}, {pipeline_mode = #tpu.pipeline_mode<synchronous>, transform_indices = @transform_7, window_bounds = array<i64: 1, 4>}, {transform_indices = @transform_8, window_bounds = array<i64: 40, 4>}]} {
    %c0 = arith.constant 0 : index
    %c0_0 = arith.constant 0 : index
    %0 = vector.load %arg1[%c0, %c0_0] : memref<40x128xf32, #tpu.memory_space<vmem>>, vector<40x128xf32>
    %1 = arith.truncf %0 : vector<40x128xf32> to vector<40x128xbf16>
    %c0_1 = arith.constant 0 : index
    %c0_2 = arith.constant 0 : index
    %2 = vector.load %arg2[%c0_1, %c0_2] : memref<128x256xbf16, #tpu.memory_space<vmem>>, vector<128x256xbf16>
    %cst = arith.constant dense<0.000000e+00> : vector<40x256xf32>
    %3 = tpu.matmul %1, %2, %cst {dimension_numbers = #tpu.dot_dimension_numbers<[1], [0], [0], [1], [0, 0, 1, 1], [], []>} : vector<40x128xbf16>, vector<128x256xbf16>, vector<40x256xf32> -> vector<40x256xf32>
    %c0_3 = arith.constant 0 : index
    %c0_4 = arith.constant 0 : index
    %4 = vector.load %arg3[%c0_3, %c0_4] : memref<1x256xf32, #tpu.memory_space<vmem>>, vector<1x256xf32>
    %5 = vector.broadcast %4 : vector<1x256xf32> to vector<40x256xf32>
    %6 = arith.addf %3, %5 : vector<40x256xf32>
    %7 = math.tanh %6 : vector<40x256xf32>
    %c0_5 = arith.constant 0 : index
    %c0_6 = arith.constant 0 : index
    %8 = vector.load %arg4[%c0_5, %c0_6] : memref<256x256xbf16, #tpu.memory_space<vmem>>, vector<256x256xbf16>
    %9 = arith.truncf %7 : vector<40x256xf32> to vector<40x256xbf16>
    %cst_7 = arith.constant dense<0.000000e+00> : vector<40x256xf32>
    %10 = tpu.matmul %9, %8, %cst_7 {dimension_numbers = #tpu.dot_dimension_numbers<[1], [0], [0], [1], [0, 0, 1, 1], [], []>} : vector<40x256xbf16>, vector<256x256xbf16>, vector<40x256xf32> -> vector<40x256xf32>
    %c0_8 = arith.constant 0 : index
    %c0_9 = arith.constant 0 : index
    %11 = vector.load %arg5[%c0_8, %c0_9] : memref<1x256xf32, #tpu.memory_space<vmem>>, vector<1x256xf32>
    %12 = vector.broadcast %11 : vector<1x256xf32> to vector<40x256xf32>
    %13 = arith.addf %10, %12 : vector<40x256xf32>
    %14 = math.tanh %13 : vector<40x256xf32>
    %c0_10 = arith.constant 0 : index
    %c0_11 = arith.constant 0 : index
    %15 = vector.load %arg6[%c0_10, %c0_11] : memref<1x256xf32, #tpu.memory_space<vmem>>, vector<1x256xf32>
    %16 = vector.broadcast %15 : vector<1x256xf32> to vector<40x256xf32>
    %17 = arith.mulf %14, %16 : vector<40x256xf32>
    %18 = arith.addf %17, %7 : vector<40x256xf32>
    %c0_12 = arith.constant 0 : index
    %c0_13 = arith.constant 0 : index
    %19 = vector.load %arg7[%c0_12, %c0_13] : memref<256x4xbf16, #tpu.memory_space<vmem>>, vector<256x4xbf16>
    %20 = arith.truncf %18 : vector<40x256xf32> to vector<40x256xbf16>
    %cst_14 = arith.constant dense<0.000000e+00> : vector<40x4xf32>
    %21 = tpu.matmul %20, %19, %cst_14 {dimension_numbers = #tpu.dot_dimension_numbers<[1], [0], [0], [1], [0, 0, 1, 1], [], []>} : vector<40x256xbf16>, vector<256x4xbf16>, vector<40x4xf32> -> vector<40x4xf32>
    %c0_15 = arith.constant 0 : index
    %c0_16 = arith.constant 0 : index
    %22 = vector.load %arg8[%c0_15, %c0_16] : memref<1x4xf32, #tpu.memory_space<vmem>>, vector<1x4xf32>
    %23 = vector.broadcast %22 : vector<1x4xf32> to vector<40x4xf32>
    %24 = arith.addf %21, %23 : vector<40x4xf32>
    %c0_17 = arith.constant 0 : index
    %c0_18 = arith.constant 0 : index
    %25 = vector.load %arg9[%c0_17, %c0_18] : memref<40x4xf32, #tpu.memory_space<vmem>>, vector<40x4xf32>
    tpu.vector_store %arg9[%c0_17, %c0_18], %24 {strides = array<i32>} : memref<40x4xf32, #tpu.memory_space<vmem>>, vector<40x4xf32>,
    return
  }
  func.func @transform_0(%arg0: i32) -> (i32, i32) {
    %c0_i32 = arith.constant 0 : i32
    %c0_i32_0 = arith.constant 0 : i32
    return %arg0, %c0_i32 : i32, i32
  }
  func.func @transform_1(%arg0: i32) -> (i32, i32) {
    %c0_i32 = arith.constant 0 : i32
    %c0_i32_0 = arith.constant 0 : i32
    %c0_i32_1 = arith.constant 0 : i32
    return %c0_i32, %c0_i32_0 : i32, i32
  }
  func.func @transform_2(%arg0: i32) -> (i32, i32) {
    %c0_i32 = arith.constant 0 : i32
    %c0_i32_0 = arith.constant 0 : i32
    %c0_i32_1 = arith.constant 0 : i32
    return %c0_i32, %c0_i32_0 : i32, i32
  }
  func.func @transform_3(%arg0: i32) -> (i32, i32) {
    %c0_i32 = arith.constant 0 : i32
    %c0_i32_0 = arith.constant 0 : i32
    %c0_i32_1 = arith.constant 0 : i32
    return %c0_i32, %c0_i32_0 : i32, i32
  }
  func.func @transform_4(%arg0: i32) -> (i32, i32) {
    %c0_i32 = arith.constant 0 : i32
    %c0_i32_0 = arith.constant 0 : i32
    %c0_i32_1 = arith.constant 0 : i32
    return %c0_i32, %c0_i32_0 : i32, i32
  }
  func.func @transform_5(%arg0: i32) -> (i32, i32) {
    %c0_i32 = arith.constant 0 : i32
    %c0_i32_0 = arith.constant 0 : i32
    %c0_i32_1 = arith.constant 0 : i32
    return %c0_i32, %c0_i32_0 : i32, i32
  }
  func.func @transform_6(%arg0: i32) -> (i32, i32) {
    %c0_i32 = arith.constant 0 : i32
    %c0_i32_0 = arith.constant 0 : i32
    %c0_i32_1 = arith.constant 0 : i32
    return %c0_i32, %c0_i32_0 : i32, i32
  }
  func.func @transform_7(%arg0: i32) -> (i32, i32) {
    %c0_i32 = arith.constant 0 : i32
    %c0_i32_0 = arith.constant 0 : i32
    %c0_i32_1 = arith.constant 0 : i32
    return %c0_i32, %c0_i32_0 : i32, i32
  }
  func.func @transform_8(%arg0: i32) -> (i32, i32) {
    %c0_i32 = arith.constant 0 : i32
    %c0_i32_0 = arith.constant 0 : i32
    return %arg0, %c0_i32 : i32, i32
  }
}

</mosaic_0001>

<llo_original>
// kernel: tpu_custom_call.1
$region0: #{tpu_custom_call.1}
  #allocation0 [shape = 'u32[]', space=smem, size = 0x4, offset = 0x4, fixed_abs, tag = 'smem constant byte address 0x4 - core index']
  #allocation1 [shape = 'u32[144,128]{1,0:T(1,128)}', space=vmem, size = 0x12000, scoped, tag = 'internal scratch']
  %s0 = inlined_call_operand.hbm [shape: f32[150,128], index: 0, kind: input, shape index: {}]
  %s1 = inlined_call_operand.vmem [shape: bf16[128,256], index: 1, kind: input, shape index: {}]
  %s2 = inlined_call_operand.vmem [shape: f32[1,256], index: 2, kind: input, shape index: {}]
  %s3 = inlined_call_operand.hbm [shape: bf16[256,256], index: 3, kind: input, shape index: {}]
  %s4 = inlined_call_operand.vmem [shape: f32[1,256], index: 4, kind: input, shape index: {}]
  %s5 = inlined_call_operand.vmem [shape: f32[1,256], index: 5, kind: input, shape index: {}]
  %s6 = inlined_call_operand.vmem [shape: bf16[256,4], index: 6, kind: input, shape index: {}]
  %s7 = inlined_call_operand.vmem [shape: f32[1,4], index: 7, kind: input, shape index: {}]
  %s8 = inlined_call_operand.vmem [shape: f32[150,4], index: 8, kind: output, shape index: {}]
  %s9 = sld [smem:[#allocation0]]
  $region121: #{tpu_custom_call.1} parent=0
    _
  %s11 = ssub.s32 1, %s9
  %s12 = scalar_select 0, %s11, %s9
  $region1: #{tpu_custom_call.1} parent=0
    #allocation2 [shape = 'u8[40960]{0}', space=vmem, size = 0xa000, scoped, tag = 'input window, operand 0']
    #allocation3 [shape = 's32[2]{0}', space=sflag, size = 0x8, scoped, tag = 'scoped memory for tpu_custom_call.1']
    #allocation4 [shape = 'u8[131072]{0}', space=vmem, size = 0x20000, scoped, tag = 'input window, operand 3, single buffered']
    #allocation5 [shape = 's32[1]{0}', space=sflag, size = 0x4, scoped, tag = 'scoped memory for tpu_custom_call.1']
    #allocation6 [shape = 'u8[40960]{0}', space=vmem, size = 0xa000, scoped, tag = 'output window, operand 0']
    %13 = vsyncpa [#allocation3], 0
    %s14 = scalar_lea.sflag [#allocation3], 1
    %15 = vsyncpa %s14, 0
    %16 = vsyncpa [#allocation5], 0
    loop: start=0, step=1, limit=6
    $region2: #{tpu_custom_call.1} parent=1 // loop_pre_header
      _
    $region3: #{tpu_custom_call.1} parent=1 // loop_header
      %s18 = sphi 0, %s22
      %p19 = scmp.ge.s32.totalorder %s18, 6
      %s28 = sphi 0, %s30
      %s31 = sphi 0, %s28
      %s32 = sphi 0, %s31
      %s48 = sphi 0, %s32
      %s52 = sphi 0, %s52
      %s54 = sphi 0, %s52
      %s55 = sphi 0, %s54
      %s69 = sphi 0, %s55
      %s73 = sphi 0, %s73
      %s75 = sphi 0, %s73
      %s76 = sphi 0, %s75
      %s90 = sphi 0, %s76
      %s94 = sphi 0, %s94
      %s96 = sphi 0, %s94
      %s97 = sphi 0, %s96
      %s111 = sphi 0, %s97
      %s115 = sphi 0, %s115
      %s117 = sphi 0, %s115
      %s118 = sphi 0, %s117
      %s132 = sphi 0, %s118
      %s136 = sphi 0, %s136
      %s138 = sphi 0, %s136
      %s139 = sphi 0, %s138
      %s153 = sphi 0, %s139
      %s157 = sphi 0, %s157
      %s159 = sphi 0, %s157
      %s160 = sphi 0, %s159
      %s174 = sphi 0, %s160
      %s178 = sphi 0, %s178
      %s180 = sphi 0, %s178
      %s181 = sphi 0, %s180
      %s195 = sphi 0, %s181
      %s201 = sphi 0, %s203
      %s204 = sphi 0, %s201
      %s205 = sphi 0, %s204
      %s221 = sphi 0, %s205
    $region4: #{tpu_custom_call.1} parent=1 // loop_header_branch
      %21 = sbr.rel (%p19) target = $region8
    $region5: #{tpu_custom_call.1} parent=1 // loop_body
      %s23 = ssub.s32 %s18, 1
      %s24 = ssub.s32 %s18, 2
      %s25 = sadd.s32 %s18, 1
      %s26 = ssub.s32 %s18, %s25
      %p27 = scmp.eq.s32.totalorder %s26, 0
      %s29 = sadd.s32 %s28, 1
      %s30 = scalar_select %p27, %s28, %s29
      %p33 = pneg %p27
      %p34 = scmp.eq.s32.totalorder %s18, 3
      %p35 = por %p33, %p34
      %p36 = scmp.ne.s32.totalorder %s28, %s31
      %p37 = scmp.eq.s32.totalorder %s18, 0
      %p38 = por %p36, %p37
      %p39 = scmp.ne.s32.totalorder %s28, %s31
      %p40 = scmp.eq.s32.totalorder %s23, 3
      %p41 = por %p39, %p40
      %p42 = scmp.ne.s32.totalorder %s31, %s32
      %p43 = scmp.eq.s32.totalorder %s23, 0
      %p44 = por %p42, %p43
      %p45 = scmp.ne.s32.totalorder %s31, %s32
      %p46 = scmp.eq.s32.totalorder %s24, 3
      %p47 = por %p45, %p46
      %p49 = scmp.ne.s32.totalorder %s32, %s48
      %p50 = scmp.eq.s32.totalorder %s24, 0
      %p51 = por %p49, %p50
      %s53 = sadd.s32 %s52, 1
      %p56 = scmp.eq.s32.totalorder %s18, 3
      %p57 = scmp.ne.s32.totalorder %s52, %s54
      %p58 = scmp.eq.s32.totalorder %s18, 0
      %p59 = por %p57, %p58
      %p60 = scmp.ne.s32.totalorder %s52, %s54
      %p61 = scmp.eq.s32.totalorder %s23, 3
      %p62 = por %p60, %p61
      %p63 = scmp.ne.s32.totalorder %s54, %s55
      %p64 = scmp.eq.s32.totalorder %s23, 0
      %p65 = por %p63, %p64
      %p66 = scmp.ne.s32.totalorder %s54, %s55
      %p67 = scmp.eq.s32.totalorder %s24, 3
      %p68 = por %p66, %p67
      %p70 = scmp.ne.s32.totalorder %s55, %s69
      %p71 = scmp.eq.s32.totalorder %s24, 0
      %p72 = por %p70, %p71
      %s74 = sadd.s32 %s73, 1
      %p77 = scmp.eq.s32.totalorder %s18, 3
      %p78 = scmp.ne.s32.totalorder %s73, %s75
      %p79 = scmp.eq.s32.totalorder %s18, 0
      %p80 = por %p78, %p79
      %p81 = scmp.ne.s32.totalorder %s73, %s75
      %p82 = scmp.eq.s32.totalorder %s23, 3
      %p83 = por %p81, %p82
      %p84 = scmp.ne.s32.totalorder %s75, %s76
      %p85 = scmp.eq.s32.totalorder %s23, 0
      %p86 = por %p84, %p85
      %p87 = scmp.ne.s32.totalorder %s75, %s76
      %p88 = scmp.eq.s32.totalorder %s24, 3
      %p89 = por %p87, %p88
      %p91 = scmp.ne.s32.totalorder %s76, %s90
      %p92 = scmp.eq.s32.totalorder %s24, 0
      %p93 = por %p91, %p92
      %s95 = sadd.s32 %s94, 1
      %p98 = scmp.eq.s32.totalorder %s18, 3
      %p99 = scmp.ne.s32.totalorder %s94, %s96
      %p100 = scmp.eq.s32.totalorder %s18, 0
      %p101 = por %p99, %p100
      %p102 = scmp.ne.s32.totalorder %s94, %s96
      %p103 = scmp.eq.s32.totalorder %s23, 3
      %p104 = por %p102, %p103
      %p105 = scmp.ne.s32.totalorder %s96, %s97
      %p106 = scmp.eq.s32.totalorder %s23, 0
      %p107 = por %p105, %p106
      %p108 = scmp.ne.s32.totalorder %s96, %s97
      %p109 = scmp.eq.s32.totalorder %s24, 3
      %p110 = por %p108, %p109
      %p112 = scmp.ne.s32.totalorder %s97, %s111
      %p113 = scmp.eq.s32.totalorder %s24, 0
      %p114 = por %p112, %p113
      %s116 = sadd.s32 %s115, 1
      %p119 = scmp.eq.s32.totalorder %s18, 3
      %p120 = scmp.ne.s32.totalorder %s115, %s117
      %p121 = scmp.eq.s32.totalorder %s18, 0
      %p122 = por %p120, %p121
      %p123 = scmp.ne.s32.totalorder %s115, %s117
      %p124 = scmp.eq.s32.totalorder %s23, 3
      %p125 = por %p123, %p124
      %p126 = scmp.ne.s32.totalorder %s117, %s118
      %p127 = scmp.eq.s32.totalorder %s23, 0
      %p128 = por %p126, %p127
      %p129 = scmp.ne.s32.totalorder %s117, %s118
      %p130 = scmp.eq.s32.totalorder %s24, 3
      %p131 = por %p129, %p130
      %p133 = scmp.ne.s32.totalorder %s118, %s132
      %p134 = scmp.eq.s32.totalorder %s24, 0
      %p135 = por %p133, %p134
      %s137 = sadd.s32 %s136, 1
      %p140 = scmp.eq.s32.totalorder %s18, 3
      %p141 = scmp.ne.s32.totalorder %s136, %s138
      %p142 = scmp.eq.s32.totalorder %s18, 0
      %p143 = por %p141, %p142
      %p144 = scmp.ne.s32.totalorder %s136, %s138
      %p145 = scmp.eq.s32.totalorder %s23, 3
      %p146 = por %p144, %p145
      %p147 = scmp.ne.s32.totalorder %s138, %s139
      %p148 = scmp.eq.s32.totalorder %s23, 0
      %p149 = por %p147, %p148
      %p150 = scmp.ne.s32.totalorder %s138, %s139
      %p151 = scmp.eq.s32.totalorder %s24, 3
      %p152 = por %p150, %p151
      %p154 = scmp.ne.s32.totalorder %s139, %s153
      %p155 = scmp.eq.s32.totalorder %s24, 0
      %p156 = por %p154, %p155
      %s158 = sadd.s32 %s157, 1
      %p161 = scmp.eq.s32.totalorder %s18, 3
      %p162 = scmp.ne.s32.totalorder %s157, %s159
      %p163 = scmp.eq.s32.totalorder %s18, 0
      %p164 = por %p162, %p163
      %p165 = scmp.ne.s32.totalorder %s157, %s159
      %p166 = scmp.eq.s32.totalorder %s23, 3
      %p167 = por %p165, %p166
      %p168 = scmp.ne.s32.totalorder %s159, %s160
      %p169 = scmp.eq.s32.totalorder %s23, 0
      %p170 = por %p168, %p169
      %p171 = scmp.ne.s32.totalorder %s159, %s160
      %p172 = scmp.eq.s32.totalorder %s24, 3
      %p173 = por %p171, %p172
      %p175 = scmp.ne.s32.totalorder %s160, %s174
      %p176 = scmp.eq.s32.totalorder %s24, 0
      %p177 = por %p175, %p176
      %s179 = sadd.s32 %s178, 1
      %p182 = scmp.eq.s32.totalorder %s18, 3
      %p183 = scmp.ne.s32.totalorder %s178, %s180
      %p184 = scmp.eq.s32.totalorder %s18, 0
      %p185 = por %p183, %p184
      %p186 = scmp.ne.s32.totalorder %s178, %s180
      %p187 = scmp.eq.s32.totalorder %s23, 3
      %p188 = por %p186, %p187
      %p189 = scmp.ne.s32.totalorder %s180, %s181
      %p190 = scmp.eq.s32.totalorder %s23, 0
      %p191 = por %p189, %p190
      %p192 = scmp.ne.s32.totalorder %s180, %s181
      %p193 = scmp.eq.s32.totalorder %s24, 3
      %p194 = por %p192, %p193
      %p196 = scmp.ne.s32.totalorder %s181, %s195
      %p197 = scmp.eq.s32.totalorder %s24, 0
      %p198 = por %p196, %p197
      %s199 = ssub.s32 %s18, %s25
      %p200 = scmp.eq.s32.totalorder %s199, 0
      %s202 = sadd.s32 %s201, 1
      %s203 = scalar_select %p200, %s201, %s202
      %p206 = pneg %p200
      %p207 = scmp.eq.s32.totalorder %s18, 3
      %p208 = por %p206, %p207
      %p209 = scmp.ne.s32.totalorder %s201, %s204
      %p210 = scmp.eq.s32.totalorder %s18, 0
      %p211 = por %p209, %p210
      %p212 = scmp.ne.s32.totalorder %s201, %s204
      %p213 = scmp.eq.s32.totalorder %s23, 3
      %p214 = por %p212, %p213
      %p215 = scmp.ne.s32.totalorder %s204, %s205
      %p216 = scmp.eq.s32.totalorder %s23, 0
      %p217 = por %p215, %p216
      %p218 = scmp.ne.s32.totalorder %s204, %s205
      %p219 = scmp.eq.s32.totalorder %s24, 3
      %p220 = por %p218, %p219
      %p222 = scmp.ne.s32.totalorder %s205, %s221
      %p223 = scmp.eq.s32.totalorder %s24, 0
      %p224 = por %p222, %p223
      %p225 = scmp.le.s32.totalorder 1, %s18
      %p226 = scmp.lt.s32.totalorder %s18, 5
      %p227 = pnand %p225, %p226
      %p228 = pneg %p227
      // Predicated region
      $region9: #{tpu_custom_call.1} parent=5 // pred_check
        _
      $region10: #{tpu_custom_call.1} parent=5 // pred_check_branch
        %230 = sbr.rel (%p227) target = $region12
      $region11: #{tpu_custom_call.1} parent=5 // pred_region
        %s231 = ssub.s32 %s18, 1
        // Predicated region
        $region13: #{tpu_custom_call.1} parent=11 // pred_check
          %p232 = pneg %p65
        $region14: #{tpu_custom_call.1} parent=11 // pred_check_branch
          %234 = sbr.rel (%p232) target = $region16
        $region15: #{tpu_custom_call.1} parent=11 // pred_region
          _
        $region16: #{tpu_custom_call.1} parent=11 // pred_fallthru
          _
        // Predicated region
        $region17: #{tpu_custom_call.1} parent=11 // pred_check
          %p235 = pneg %p86
        $region18: #{tpu_custom_call.1} parent=11 // pred_check_branch
          %237 = sbr.rel (%p235) target = $region20
        $region19: #{tpu_custom_call.1} parent=11 // pred_region
          _
        $region20: #{tpu_custom_call.1} parent=11 // pred_fallthru
          _
        // Predicated region
        $region21: #{tpu_custom_call.1} parent=11 // pred_check
          %p238 = pneg %p107
        $region22: #{tpu_custom_call.1} parent=11 // pred_check_branch
          %240 = sbr.rel (%p238) target = $region24
        $region23: #{tpu_custom_call.1} parent=11 // pred_region
          %s242 = ssub.s32 4096, 4096
          %243 = vsyncadd [#allocation5], %s242
          %s244 = sshll.u32 [#allocation4], 4
          %s245 = int_to_ptr.vmem [resolvable:$true] %s244
          %250 = dma.hbm_to_vmem [thread:$0]  %s3, 4096, %s245, [#allocation5], 128, 128, 8
        $region24: #{tpu_custom_call.1} parent=11 // pred_fallthru
          _
        // Predicated region
        $region25: #{tpu_custom_call.1} parent=11 // pred_check
          %p251 = pneg %p128
        $region26: #{tpu_custom_call.1} parent=11 // pred_check_branch
          %253 = sbr.rel (%p251) target = $region28
        $region27: #{tpu_custom_call.1} parent=11 // pred_region
          _
        $region28: #{tpu_custom_call.1} parent=11 // pred_fallthru
          _
        // Predicated region
        $region29: #{tpu_custom_call.1} parent=11 // pred_check
          %p254 = pneg %p149
        $region30: #{tpu_custom_call.1} parent=11 // pred_check_branch
          %256 = sbr.rel (%p254) target = $region32
        $region31: #{tpu_custom_call.1} parent=11 // pred_region
          _
        $region32: #{tpu_custom_call.1} parent=11 // pred_fallthru
          _
        // Predicated region
        $region33: #{tpu_custom_call.1} parent=11 // pred_check
          %p257 = pneg %p170
        $region34: #{tpu_custom_call.1} parent=11 // pred_check_branch
          %259 = sbr.rel (%p257) target = $region36
        $region35: #{tpu_custom_call.1} parent=11 // pred_region
          _
        $region36: #{tpu_custom_call.1} parent=11 // pred_fallthru
          _
        // Predicated region
        $region37: #{tpu_custom_call.1} parent=11 // pred_check
          %p260 = pneg %p191
        $region38: #{tpu_custom_call.1} parent=11 // pred_check_branch
          %262 = sbr.rel (%p260) target = $region40
        $region39: #{tpu_custom_call.1} parent=11 // pred_region
          _
        $region40: #{tpu_custom_call.1} parent=11 // pred_fallthru
          _
      $region12: #{tpu_custom_call.1} parent=5 // pred_fallthru
        _
      %p263 = scmp.lt.s32.totalorder %s18, 4
      // Predicated region
      $region41: #{tpu_custom_call.1} parent=5 // pred_check
        %p264 = pneg %p263
      $region42: #{tpu_custom_call.1} parent=5 // pred_check_branch
        %266 = sbr.rel (%p264) target = $region44
      $region43: #{tpu_custom_call.1} parent=5 // pred_region
        // Predicated region
        $region45: #{tpu_custom_call.1} parent=43 // pred_check
          %p267 = pneg %p38
        $region46: #{tpu_custom_call.1} parent=43 // pred_check_branch
          %269 = sbr.rel (%p267) target = $region48
        $region47: #{tpu_custom_call.1} parent=43 // pred_region
          %s270 = sand.u32 %s28, 1
          %s271 = scalar_lea.sflag [#allocation3], %s270
          %s272 = sand.u32 %s28, 1
          %s273 = smul.addr %s272, 40
          %s274 = scalar_lea.vmem [#allocation2], %s273
          %s275 = smul.u32 5, %s18
          %s276 = ssub.s32 19, %s275
          %p277 = scmp.lt.s32.totalorder %s276, 5
          %s278 = scalar_select %p277, %s276, 5
          %s279 = smul.u32 128, %s278
          %s281 = ssub.s32 640, %s279
          %282 = vsyncadd %s271, %s281
          %p283 = scmp.ne.s32.totalorder 0, %s279
          %s284 = smul.addr %s275, 128
          %s285 = scalar_lea.hbm %s0, %s284
          %s286 = smul.u32 8, %s278
          %s287 = sshll.u32 %s274, 4
          %s288 = int_to_ptr.vmem [resolvable:$true] %s287
          %s289 = sshll.u32 %s286, 4
          %293 = dma.hbm_to_vmem [thread:$0]  (%p283), %s285, %s289, %s288, %s271, 128, 128, 8
        $region48: #{tpu_custom_call.1} parent=43 // pred_fallthru
          _
      $region44: #{tpu_custom_call.1} parent=5 // pred_fallthru
        _
      %p294 = scmp.le.s32.totalorder 1, %s18
      %p295 = scmp.lt.s32.totalorder %s18, 5
      %p296 = pnand %p294, %p295
      %p297 = pneg %p296
      // Predicated region
      $region49: #{tpu_custom_call.1} parent=5 // pred_check
        _
      $region50: #{tpu_custom_call.1} parent=5 // pred_check_branch
        %299 = sbr.rel (%p296) target = $region52
      $region51: #{tpu_custom_call.1} parent=5 // pred_region
        %s300 = ssub.s32 %s18, 1
        %s301 = sand.u32 %s31, 1
        %s302 = scalar_lea.sflag [#allocation3], %s301
        %s303 = sand.u32 %s31, 1
        %s304 = smul.addr %s303, 40
        %s305 = scalar_lea.vmem [#allocation2], %s304
        // Predicated region
        $region53: #{tpu_custom_call.1} parent=51 // pred_check
          %p306 = pneg %p44
        $region54: #{tpu_custom_call.1} parent=51 // pred_check_branch
          %308 = sbr.rel (%p306) target = $region56
        $region55: #{tpu_custom_call.1} parent=51 // pred_region
          %309 = dma.done %s302, 640
        $region56: #{tpu_custom_call.1} parent=51 // pred_fallthru
          _
        // Predicated region
        $region57: #{tpu_custom_call.1} parent=51 // pred_check
          %p310 = pneg %p107
        $region58: #{tpu_custom_call.1} parent=51 // pred_check_branch
          %312 = sbr.rel (%p310) target = $region60
        $region59: #{tpu_custom_call.1} parent=51 // pred_region
          %313 = dma.done [#allocation5], 4096
        $region60: #{tpu_custom_call.1} parent=51 // pred_fallthru
          _
        %s314 = sand.u32 %s31, 1
        %s315 = scalar_lea.sflag [#allocation3], %s314
        %s316 = sand.u32 %s31, 1
        %s317 = smul.addr %s316, 40
        %s318 = scalar_lea.vmem [#allocation2], %s317
        %p319 = pneg %p44
        %p320 = pneg %p41
        %p321 = pneg %p65
        %p322 = pneg %p62
        %p323 = pneg %p86
        %p324 = pneg %p83
        %p325 = pneg %p107
        %p326 = pneg %p104
        %p327 = pneg %p128
        %p328 = pneg %p125
        %p329 = pneg %p149
        %p330 = pneg %p146
        %p331 = pneg %p170
        %p332 = pneg %p167
        %p333 = pneg %p191
        %p334 = pneg %p188
        %p335 = pneg %p217
        %p336 = pneg %p214
        %s337 = sand.u32 %s204, 1
        %s338 = sand.u32 %s204, 1
        %s339 = smul.addr %s338, 40
        %s340 = scalar_lea.vmem [#allocation6], %s339
        %s341 = smul.u32 5, %s23
        %s342 = ssub.s32 19, %s341
        %p343 = scmp.lt.s32.totalorder %s342, 5
        %s344 = scalar_select %p343, %s342, 5
        %s345 = smul.u32 128, %s344
        %s346 = smul.u32 5, %s23
        %s347 = ssub.s32 19, %s346
        %p348 = scmp.lt.s32.totalorder %s347, 5
        %s349 = scalar_select %p348, %s347, 5
        %s350 = smul.u32 128, %s349
        %v352 = vld [vmem:[%s305] sm:$0xff]
        %v353 = vld [vmem:[%s305 + $0x8] sm:$0xff]
        %v354 = vld [vmem:[%s305 + $0x10] sm:$0xff]
        %v355 = vld [vmem:[%s305 + $0x18] sm:$0xff]
        %v356 = vld [vmem:[%s305 + $0x20] sm:$0xff]
        %v357 = vpack.c.bf16 %v353, %v352
        %v358 = vpack.c.bf16 %v355, %v354
        %v359 = vpack.c.bf16 %v356, %v356
        %v360 = vld [vmem:[%s1] sm:$0xff]
        %v361 = vld [vmem:[%s1 + $0x8] sm:$0xff]
        %v362 = vld [vmem:[%s1 + $0x10] sm:$0xff]
        %v363 = vld [vmem:[%s1 + $0x18] sm:$0xff]
        %v364 = vld [vmem:[%s1 + $0x20] sm:$0xff]
        %v365 = vld [vmem:[%s1 + $0x28] sm:$0xff]
        %v366 = vld [vmem:[%s1 + $0x30] sm:$0xff]
        %v367 = vld [vmem:[%s1 + $0x38] sm:$0xff]
        %v368 = vld [vmem:[%s1 + $0x40] sm:$0xff]
        %v369 = vld [vmem:[%s1 + $0x48] sm:$0xff]
        %v370 = vld [vmem:[%s1 + $0x50] sm:$0xff]
        %v371 = vld [vmem:[%s1 + $0x58] sm:$0xff]
        %v372 = vld [vmem:[%s1 + $0x60] sm:$0xff]
        %v373 = vld [vmem:[%s1 + $0x68] sm:$0xff]
        %v374 = vld [vmem:[%s1 + $0x70] sm:$0xff]
        %v375 = vld [vmem:[%s1 + $0x78] sm:$0xff]
        %v376 = vld [vmem:[%s2] sm:$0x3]
        %v378 = vlaneseq
        %v379 = vshrl.u32 %v378, 7
        %v380 = vsub.s32 0, %v379
        %v381 = vrot.slane %v376, %v380
        %v382 = vlaneseq
        %v383 = vshrl.u32 %v382, 7
        %v384 = vsub.s32 1, %v383
        %v385 = vrot.slane %v376, %v384
        %v404 = vunpack.c.l.b16 %v360
        %v405 = vunpack.c.h.b16 %v360
        %v406 = vunpack.c.l.b16 %v361
        %v407 = vunpack.c.h.b16 %v361
        %v408 = vunpack.c.l.b16 %v362
        %v409 = vunpack.c.h.b16 %v362
        %v410 = vunpack.c.l.b16 %v363
        %v411 = vunpack.c.h.b16 %v363
        %v412 = vunpack.c.l.b16 %v364
        %v413 = vunpack.c.h.b16 %v364
        %v414 = vunpack.c.l.b16 %v365
        %v415 = vunpack.c.h.b16 %v365
        %v416 = vunpack.c.l.b16 %v366
        %v417 = vunpack.c.h.b16 %v366
        %v418 = vunpack.c.l.b16 %v367
        %v419 = vunpack.c.h.b16 %v367
        %v420 = vunpack.c.l.b16 %v368
        %v421 = vunpack.c.h.b16 %v368
        %v422 = vunpack.c.l.b16 %v369
        %v423 = vunpack.c.h.b16 %v369
        %v424 = vunpack.c.l.b16 %v370
        %v425 = vunpack.c.h.b16 %v370
        %v426 = vunpack.c.l.b16 %v371
        %v427 = vunpack.c.h.b16 %v371
        %v428 = vunpack.c.l.b16 %v372
        %v429 = vunpack.c.h.b16 %v372
        %v430 = vunpack.c.l.b16 %v373
        %v431 = vunpack.c.h.b16 %v373
        %v432 = vunpack.c.l.b16 %v374
        %v433 = vunpack.c.h.b16 %v374
        %v434 = vunpack.c.l.b16 %v375
        %v435 = vunpack.c.h.b16 %v375
        %v436 = vpack.c.b16 %v406, %v404
        %v437 = vpack.c.b16 %v407, %v405
        %v438 = vpack.c.b16 %v410, %v408
        %v439 = vpack.c.b16 %v411, %v409
        %v440 = vpack.c.b16 %v414, %v412
        %v441 = vpack.c.b16 %v415, %v413
        %v442 = vpack.c.b16 %v418, %v416
        %v443 = vpack.c.b16 %v419, %v417
        %v444 = vpack.c.b16 %v422, %v420
        %v445 = vpack.c.b16 %v423, %v421
        %v446 = vpack.c.b16 %v426, %v424
        %v447 = vpack.c.b16 %v427, %v425
        %v448 = vpack.c.b16 %v430, %v428
        %v449 = vpack.c.b16 %v431, %v429
        %v450 = vpack.c.b16 %v434, %v432
        %v451 = vpack.c.b16 %v435, %v433
        %468 = vmatprep.subr.bf16.mxu0 %v437
        %469 = vmatpush1.bf16.msra.mxu0 %v436
        %470 = vmatprep.subr.bf16.mxu0 %v439
        %471 = vmatpush1.bf16.msra.mxu0 %v438
        %472 = vmatprep.subr.bf16.mxu0 %v441
        %473 = vmatpush1.bf16.msra.mxu0 %v440
        %474 = vmatprep.subr.bf16.mxu0 %v443
        %475 = vmatpush1.bf16.msra.mxu0 %v442
        %476 = vmatprep.subr.bf16.mxu0 %v445
        %477 = vmatpush1.bf16.msra.mxu0 %v444
        %478 = vmatprep.subr.bf16.mxu0 %v447
        %479 = vmatpush1.bf16.msra.mxu0 %v446
        %480 = vmatprep.subr.bf16.mxu0 %v449
        %481 = vmatpush1.bf16.msra.mxu0 %v448
        %482 = vmatprep.subr.bf16.mxu0 %v451
        %483 = vmatpush1.bf16.msra.mxu0 %v450
        %484 = vmatprep.subr.bf16.mxu0 0
        %485 = vmatpush1.bf16.msra.mxu0 0
        %486 = vmatprep.subr.bf16.mxu0 0
        %487 = vmatpush1.bf16.msra.mxu0 0
        %488 = vmatprep.subr.bf16.mxu0 0
        %489 = vmatpush1.bf16.msra.mxu0 0
        %490 = vmatprep.subr.bf16.mxu0 0
        %491 = vmatpush1.bf16.msra.mxu0 0
        %492 = vmatprep.subr.bf16.mxu0 0
        %493 = vmatpush1.bf16.msra.mxu0 0
        %494 = vmatprep.subr.bf16.mxu0 0
        %495 = vmatpush1.bf16.msra.mxu0 0
        %496 = vmatprep.subr.bf16.mxu0 0
        %497 = vmatpush1.bf16.msra.mxu0 0
        %498 = vmatprep.subr.bf16.mxu0 0
        %499 = vmatpush1.bf16.msra.mxu0 0
        %500 = vmatprep.mubr.bf16.mxu0 0
        %501 = vmatmul.mubr.bf16.gmra.mrb[0].mxu0 %v357
        %v502 = vpop.f32.mrb[0].mxu0
        %v503 = vadd.f32 %v381, %v502
        %v504 = vpop.f32.mrb[0].mxu0
        %v505 = vadd.f32 %v385, %v504
        %v506 = vpop.f32.mrb[0].mxu0
        %v507 = vadd.f32 %v381, %v506
        %v508 = vpop.f32.mrb[0].mxu0
        %v509 = vadd.f32 %v385, %v508
        %510 = vmatprep.mubr.bf16.mxu0 0
        %511 = vmatmul.mubr.bf16.gmra.mrb[0].mxu0 %v358
        %v512 = vpop.f32.mrb[0].mxu0
        %v513 = vadd.f32 %v381, %v512
        %v514 = vpop.f32.mrb[0].mxu0
        %v515 = vadd.f32 %v385, %v514
        %v516 = vpop.f32.mrb[0].mxu0
        %v517 = vadd.f32 %v381, %v516
        %v518 = vpop.f32.mrb[0].mxu0
        %v519 = vadd.f32 %v385, %v518
        %520 = vmatprep.mubr.bf16.mxu0 0
        %521 = vmatmul.mubr.bf16.gmra.mrb[0].mxu0 %v359
        %v522 = vpop.f32.mrb[0].mxu0
        %v523 = vadd.f32 %v381, %v522
        %v524 = vpop.f32.mrb[0].mxu0
        %v525 = vadd.f32 %v385, %v524
        %v526 = vpop.f32.mrb[0].mxu0
        %v527 = vpop.f32.mrb[0].mxu0
        %528 = vdwg.mxu0
        %v529 = vtanh.pop %v503
        %v530 = vtanh.pop %v505
        %v531 = vtanh.pop %v507
        %v532 = vtanh.pop %v509
        %v533 = vtanh.pop %v513
        %v534 = vtanh.pop %v515
        %v535 = vtanh.pop %v517
        %v536 = vtanh.pop %v519
        %v537 = vtanh.pop %v523
        %v538 = vtanh.pop %v525
        %v539 = vld [vmem:[#allocation4] sm:$0xff]
        %v540 = vld [vmem:[#allocation4 + $0x8] sm:$0xff]
        %v541 = vld [vmem:[#allocation4 + $0x10] sm:$0xff]
        %v542 = vld [vmem:[#allocation4 + $0x18] sm:$0xff]
        %v543 = vld [vmem:[#allocation4 + $0x20] sm:$0xff]
        %v544 = vld [vmem:[#allocation4 + $0x28] sm:$0xff]
        %v545 = vld [vmem:[#allocation4 + $0x30] sm:$0xff]
        %v546 = vld [vmem:[#allocation4 + $0x38] sm:$0xff]
        %v547 = vld [vmem:[#allocation4 + $0x40] sm:$0xff]
        %v548 = vld [vmem:[#allocation4 + $0x48] sm:$0xff]
        %v549 = vld [vmem:[#allocation4 + $0x50] sm:$0xff]
        %v550 = vld [vmem:[#allocation4 + $0x58] sm:$0xff]
        %v551 = vld [vmem:[#allocation4 + $0x60] sm:$0xff]
        %v552 = vld [vmem:[#allocation4 + $0x68] sm:$0xff]
        %v553 = vld [vmem:[#allocation4 + $0x70] sm:$0xff]
        %v554 = vld [vmem:[#allocation4 + $0x78] sm:$0xff]
        %v555 = vld [vmem:[#allocation4 + $0x80] sm:$0xff]
        %v556 = vld [vmem:[#allocation4 + $0x88] sm:$0xff]
        %v557 = vld [vmem:[#allocation4 + $0x90] sm:$0xff]
        %v558 = vld [vmem:[#allocation4 + $0x98] sm:$0xff]
        %v559 = vld [vmem:[#allocation4 + $0xa0] sm:$0xff]
        %v560 = vld [vmem:[#allocation4 + $0xa8] sm:$0xff]
        %v561 = vld [vmem:[#allocation4 + $0xb0] sm:$0xff]
        %v562 = vld [vmem:[#allocation4 + $0xb8] sm:$0xff]
        %v563 = vld [vmem:[#allocation4 + $0xc0] sm:$0xff]
        %v564 = vld [vmem:[#allocation4 + $0xc8] sm:$0xff]
        %v565 = vld [vmem:[#allocation4 + $0xd0] sm:$0xff]
        %v566 = vld [vmem:[#allocation4 + $0xd8] sm:$0xff]
        %v567 = vld [vmem:[#allocation4 + $0xe0] sm:$0xff]
        %v568 = vld [vmem:[#allocation4 + $0xe8] sm:$0xff]
        %v569 = vld [vmem:[#allocation4 + $0xf0] sm:$0xff]
        %v570 = vld [vmem:[#allocation4 + $0xf8] sm:$0xff]
        %v571 = vpack.c.bf16 %v531, %v529
        %v572 = vpack.c.bf16 %v532, %v530
        %v573 = vpack.c.bf16 %v535, %v533
        %v574 = vpack.c.bf16 %v536, %v534
        %v575 = vpack.c.bf16 %v537, %v537
        %v576 = vpack.c.bf16 %v538, %v538
        %v577 = vld [vmem:[%s4] sm:$0x3]
        %v579 = vlaneseq
        %v580 = vshrl.u32 %v579, 7
        %v581 = vsub.s32 0, %v580
        %v582 = vrot.slane %v577, %v581
        %v583 = vlaneseq
        %v584 = vshrl.u32 %v583, 7
        %v585 = vsub.s32 1, %v584
        %v586 = vrot.slane %v577, %v585
        %v621 = vunpack.c.l.b16 %v539
        %v622 = vunpack.c.h.b16 %v539
        %v623 = vunpack.c.l.b16 %v540
        %v624 = vunpack.c.h.b16 %v540
        %v625 = vunpack.c.l.b16 %v541
        %v626 = vunpack.c.h.b16 %v541
        %v627 = vunpack.c.l.b16 %v542
        %v628 = vunpack.c.h.b16 %v542
        %v629 = vunpack.c.l.b16 %v543
        %v630 = vunpack.c.h.b16 %v543
        %v631 = vunpack.c.l.b16 %v544
        %v632 = vunpack.c.h.b16 %v544
        %v633 = vunpack.c.l.b16 %v545
        %v634 = vunpack.c.h.b16 %v545
        %v635 = vunpack.c.l.b16 %v546
        %v636 = vunpack.c.h.b16 %v546
        %v637 = vunpack.c.l.b16 %v547
        %v638 = vunpack.c.h.b16 %v547
        %v639 = vunpack.c.l.b16 %v548
        %v640 = vunpack.c.h.b16 %v548
        %v641 = vunpack.c.l.b16 %v549
        %v642 = vunpack.c.h.b16 %v549
        %v643 = vunpack.c.l.b16 %v550
        %v644 = vunpack.c.h.b16 %v550
        %v645 = vunpack.c.l.b16 %v551
        %v646 = vunpack.c.h.b16 %v551
        %v647 = vunpack.c.l.b16 %v552
        %v648 = vunpack.c.h.b16 %v552
        %v649 = vunpack.c.l.b16 %v553
        %v650 = vunpack.c.h.b16 %v553
        %v651 = vunpack.c.l.b16 %v554
        %v652 = vunpack.c.h.b16 %v554
        %v653 = vunpack.c.l.b16 %v555
        %v654 = vunpack.c.h.b16 %v555
        %v655 = vunpack.c.l.b16 %v556
        %v656 = vunpack.c.h.b16 %v556
        %v657 = vunpack.c.l.b16 %v557
        %v658 = vunpack.c.h.b16 %v557
        %v659 = vunpack.c.l.b16 %v558
        %v660 = vunpack.c.h.b16 %v558
        %v661 = vunpack.c.l.b16 %v559
        %v662 = vunpack.c.h.b16 %v559
        %v663 = vunpack.c.l.b16 %v560
        %v664 = vunpack.c.h.b16 %v560
        %v665 = vunpack.c.l.b16 %v561
        %v666 = vunpack.c.h.b16 %v561
        %v667 = vunpack.c.l.b16 %v562
        %v668 = vunpack.c.h.b16 %v562
        %v669 = vunpack.c.l.b16 %v563
        %v670 = vunpack.c.h.b16 %v563
        %v671 = vunpack.c.l.b16 %v564
        %v672 = vunpack.c.h.b16 %v564
        %v673 = vunpack.c.l.b16 %v565
        %v674 = vunpack.c.h.b16 %v565
        %v675 = vunpack.c.l.b16 %v566
        %v676 = vunpack.c.h.b16 %v566
        %v677 = vunpack.c.l.b16 %v567
        %v678 = vunpack.c.h.b16 %v567
        %v679 = vunpack.c.l.b16 %v568
        %v680 = vunpack.c.h.b16 %v568
        %v681 = vunpack.c.l.b16 %v569
        %v682 = vunpack.c.h.b16 %v569
        %v683 = vunpack.c.l.b16 %v570
        %v684 = vunpack.c.h.b16 %v570
        %v685 = vpack.c.b16 %v623, %v621
        %v686 = vpack.c.b16 %v624, %v622
        %v687 = vpack.c.b16 %v627, %v625
        %v688 = vpack.c.b16 %v628, %v626
        %v689 = vpack.c.b16 %v631, %v629
        %v690 = vpack.c.b16 %v632, %v630
        %v691 = vpack.c.b16 %v635, %v633
        %v692 = vpack.c.b16 %v636, %v634
        %v693 = vpack.c.b16 %v639, %v637
        %v694 = vpack.c.b16 %v640, %v638
        %v695 = vpack.c.b16 %v643, %v641
        %v696 = vpack.c.b16 %v644, %v642
        %v697 = vpack.c.b16 %v647, %v645
        %v698 = vpack.c.b16 %v648, %v646
        %v699 = vpack.c.b16 %v651, %v649
        %v700 = vpack.c.b16 %v652, %v650
        %v701 = vpack.c.b16 %v655, %v653
        %v702 = vpack.c.b16 %v656, %v654
        %v703 = vpack.c.b16 %v659, %v657
        %v704 = vpack.c.b16 %v660, %v658
        %v705 = vpack.c.b16 %v663, %v661
        %v706 = vpack.c.b16 %v664, %v662
        %v707 = vpack.c.b16 %v667, %v665
        %v708 = vpack.c.b16 %v668, %v666
        %v709 = vpack.c.b16 %v671, %v669
        %v710 = vpack.c.b16 %v672, %v670
        %v711 = vpack.c.b16 %v675, %v673
        %v712 = vpack.c.b16 %v676, %v674
        %v713 = vpack.c.b16 %v679, %v677
        %v714 = vpack.c.b16 %v680, %v678
        %v715 = vpack.c.b16 %v683, %v681
        %v716 = vpack.c.b16 %v684, %v682
        %749 = vmatprep.subr.bf16.mxu0 %v686
        %750 = vmatpush1.bf16.msra.mxu0 %v685
        %751 = vmatprep.subr.bf16.mxu0 %v688
        %752 = vmatpush1.bf16.msra.mxu0 %v687
        %753 = vmatprep.subr.bf16.mxu0 %v690
        %754 = vmatpush1.bf16.msra.mxu0 %v689
        %755 = vmatprep.subr.bf16.mxu0 %v692
        %756 = vmatpush1.bf16.msra.mxu0 %v691
        %757 = vmatprep.subr.bf16.mxu0 %v694
        %758 = vmatpush1.bf16.msra.mxu0 %v693
        %759 = vmatprep.subr.bf16.mxu0 %v696
        %760 = vmatpush1.bf16.msra.mxu0 %v695
        %761 = vmatprep.subr.bf16.mxu0 %v698
        %762 = vmatpush1.bf16.msra.mxu0 %v697
        %763 = vmatprep.subr.bf16.mxu0 %v700
        %764 = vmatpush1.bf16.msra.mxu0 %v699
        %765 = vmatprep.subr.bf16.mxu0 %v702
        %766 = vmatpush1.bf16.msra.mxu0 %v701
        %767 = vmatprep.subr.bf16.mxu0 %v704
        %768 = vmatpush1.bf16.msra.mxu0 %v703
        %769 = vmatprep.subr.bf16.mxu0 %v706
        %770 = vmatpush1.bf16.msra.mxu0 %v705
        %771 = vmatprep.subr.bf16.mxu0 %v708
        %772 = vmatpush1.bf16.msra.mxu0 %v707
        %773 = vmatprep.subr.bf16.mxu0 %v710
        %774 = vmatpush1.bf16.msra.mxu0 %v709
        %775 = vmatprep.subr.bf16.mxu0 %v712
        %776 = vmatpush1.bf16.msra.mxu0 %v711
        %777 = vmatprep.subr.bf16.mxu0 %v714
        %778 = vmatpush1.bf16.msra.mxu0 %v713
        %779 = vmatprep.subr.bf16.mxu0 %v716
        %780 = vmatpush1.bf16.msra.mxu0 %v715
        %781 = vmatprep.mubr.bf16.mxu0 %v572
        %782 = vmatmul.mubr.bf16.gmra.mrb[0].mxu0 %v571
        %v783 = vpop.f32.mrb[0].mxu0
        %v784 = vadd.f32 %v582, %v783
        %v785 = vpop.f32.mrb[0].mxu0
        %v786 = vadd.f32 %v586, %v785
        %v787 = vpop.f32.mrb[0].mxu0
        %v788 = vadd.f32 %v582, %v787
        %v789 = vpop.f32.mrb[0].mxu0
        %v790 = vadd.f32 %v586, %v789
        %791 = vmatprep.mubr.bf16.mxu0 %v574
        %792 = vmatmul.mubr.bf16.gmra.mrb[0].mxu0 %v573
        %v793 = vpop.f32.mrb[0].mxu0
        %v794 = vadd.f32 %v582, %v793
        %v795 = vpop.f32.mrb[0].mxu0
        %v796 = vadd.f32 %v586, %v795
        %v797 = vpop.f32.mrb[0].mxu0
        %v798 = vadd.f32 %v582, %v797
        %v799 = vpop.f32.mrb[0].mxu0
        %v800 = vadd.f32 %v586, %v799
        %801 = vmatprep.mubr.bf16.mxu0 %v576
        %802 = vmatmul.mubr.bf16.gmra.mrb[0].mxu0 %v575
        %v803 = vpop.f32.mrb[0].mxu0
        %v804 = vadd.f32 %v582, %v803
        %v805 = vpop.f32.mrb[0].mxu0
        %v806 = vadd.f32 %v586, %v805
        %v807 = vpop.f32.mrb[0].mxu0
        %v808 = vpop.f32.mrb[0].mxu0
        %809 = vdwg.mxu0
        %v810 = vtanh.pop %v784
        %v811 = vtanh.pop %v786
        %v812 = vtanh.pop %v788
        %v813 = vtanh.pop %v790
        %v814 = vtanh.pop %v794
        %v815 = vtanh.pop %v796
        %v816 = vtanh.pop %v798
        %v817 = vtanh.pop %v800
        %v818 = vtanh.pop %v804
        %v819 = vtanh.pop %v806
        %v820 = vld [vmem:[%s5] sm:$0x3]
        %v822 = vlaneseq
        %v823 = vshrl.u32 %v822, 7
        %v824 = vsub.s32 0, %v823
        %v825 = vrot.slane %v820, %v824
        %v826 = vlaneseq
        %v827 = vshrl.u32 %v826, 7
        %v828 = vsub.s32 1, %v827
        %v829 = vrot.slane %v820, %v828
        %v832 = vmul.f32 %v810, %v825
        %v833 = vmul.f32 %v811, %v829
        %v834 = vmul.f32 %v812, %v825
        %v835 = vmul.f32 %v813, %v829
        %v836 = vmul.f32 %v814, %v825
        %v837 = vmul.f32 %v815, %v829
        %v838 = vmul.f32 %v816, %v825
        %v839 = vmul.f32 %v817, %v829
        %v840 = vmul.f32 %v818, %v825
        %v841 = vmul.f32 %v819, %v829
        %v842 = vadd.f32 %v832, %v529
        %v843 = vadd.f32 %v833, %v530
        %v844 = vadd.f32 %v834, %v531
        %v845 = vadd.f32 %v835, %v532
        %v846 = vadd.f32 %v836, %v533
        %v847 = vadd.f32 %v837, %v534
        %v848 = vadd.f32 %v838, %v535
        %v849 = vadd.f32 %v839, %v536
        %v850 = vadd.f32 %v840, %v537
        %v851 = vadd.f32 %v841, %v538
        %v852 = vld [vmem:[%s6] sm:$0xf]
        %v853 = vld [vmem:[%s6 + $0x4] sm:$0xf]
        %v854 = vld [vmem:[%s6 + $0x8] sm:$0xf]
        %v855 = vld [vmem:[%s6 + $0xc] sm:$0xf]
        %v856 = vld [vmem:[%s6 + $0x10] sm:$0xf]
        %v857 = vld [vmem:[%s6 + $0x14] sm:$0xf]
        %v858 = vld [vmem:[%s6 + $0x18] sm:$0xf]
        %v859 = vld [vmem:[%s6 + $0x1c] sm:$0xf]
        %v860 = vld [vmem:[%s6 + $0x20] sm:$0xf]
        %v861 = vld [vmem:[%s6 + $0x24] sm:$0xf]
        %v862 = vld [vmem:[%s6 + $0x28] sm:$0xf]
        %v863 = vld [vmem:[%s6 + $0x2c] sm:$0xf]
        %v864 = vld [vmem:[%s6 + $0x30] sm:$0xf]
        %v865 = vld [vmem:[%s6 + $0x34] sm:$0xf]
        %v866 = vld [vmem:[%s6 + $0x38] sm:$0xf]
        %v867 = vld [vmem:[%s6 + $0x3c] sm:$0xf]
        %v868 = vld [vmem:[%s6 + $0x40] sm:$0xf]
        %v869 = vld [vmem:[%s6 + $0x44] sm:$0xf]
        %v870 = vld [vmem:[%s6 + $0x48] sm:$0xf]
        %v871 = vld [vmem:[%s6 + $0x4c] sm:$0xf]
        %v872 = vld [vmem:[%s6 + $0x50] sm:$0xf]
        %v873 = vld [vmem:[%s6 + $0x54] sm:$0xf]
        %v874 = vld [vmem:[%s6 + $0x58] sm:$0xf]
        %v875 = vld [vmem:[%s6 + $0x5c] sm:$0xf]
        %v876 = vld [vmem:[%s6 + $0x60] sm:$0xf]
        %v877 = vld [vmem:[%s6 + $0x64] sm:$0xf]
        %v878 = vld [vmem:[%s6 + $0x68] sm:$0xf]
        %v879 = vld [vmem:[%s6 + $0x6c] sm:$0xf]
        %v880 = vld [vmem:[%s6 + $0x70] sm:$0xf]
        %v881 = vld [vmem:[%s6 + $0x74] sm:$0xf]
        %v882 = vld [vmem:[%s6 + $0x78] sm:$0xf]
        %v883 = vld [vmem:[%s6 + $0x7c] sm:$0xf]
        %v884 = vpack.c.bf16 %v844, %v842
        %v885 = vpack.c.bf16 %v845, %v843
        %v886 = vpack.c.bf16 %v848, %v846
        %v887 = vpack.c.bf16 %v849, %v847
        %v888 = vpack.c.bf16 %v850, %v850
        %v889 = vpack.c.bf16 %v851, %v851
        %v890 = vld [vmem:[%s7] sm:$0x1]
        %v892 = vlaneseq
        %v893 = vshrl.u32 %v892, 7
        %v894 = vsub.s32 0, %v893
        %v895 = vrot.slane %v890, %v894
        %v929 = vunpack.c.l.b16 %v852
        %v930 = vunpack.c.l.b16 %v853
        %v931 = vunpack.c.l.b16 %v854
        %v932 = vunpack.c.l.b16 %v855
        %v933 = vunpack.c.l.b16 %v856
        %v934 = vunpack.c.l.b16 %v857
        %v935 = vunpack.c.l.b16 %v858
        %v936 = vunpack.c.l.b16 %v859
        %v937 = vunpack.c.l.b16 %v860
        %v938 = vunpack.c.l.b16 %v861
        %v939 = vunpack.c.l.b16 %v862
        %v940 = vunpack.c.l.b16 %v863
        %v941 = vunpack.c.l.b16 %v864
        %v942 = vunpack.c.l.b16 %v865
        %v943 = vunpack.c.l.b16 %v866
        %v944 = vunpack.c.l.b16 %v867
        %v945 = vunpack.c.l.b16 %v868
        %v946 = vunpack.c.l.b16 %v869
        %v947 = vunpack.c.l.b16 %v870
        %v948 = vunpack.c.l.b16 %v871
        %v949 = vunpack.c.l.b16 %v872
        %v950 = vunpack.c.l.b16 %v873
        %v951 = vunpack.c.l.b16 %v874
        %v952 = vunpack.c.l.b16 %v875
        %v953 = vunpack.c.l.b16 %v876
        %v954 = vunpack.c.l.b16 %v877
        %v955 = vunpack.c.l.b16 %v878
        %v956 = vunpack.c.l.b16 %v879
        %v957 = vunpack.c.l.b16 %v880
        %v958 = vunpack.c.l.b16 %v881
        %v959 = vunpack.c.l.b16 %v882
        %v960 = vunpack.c.l.b16 %v883
        %v961 = vpack.c.b16 %v930, %v929
        %v962 = vpack.c.b16 %v932, %v931
        %v963 = vpack.c.b16 %v934, %v933
        %v964 = vpack.c.b16 %v936, %v935
        %v965 = vpack.c.b16 %v938, %v937
        %v966 = vpack.c.b16 %v940, %v939
        %v967 = vpack.c.b16 %v942, %v941
        %v968 = vpack.c.b16 %v944, %v943
        %v969 = vpack.c.b16 %v946, %v945
        %v970 = vpack.c.b16 %v948, %v947
        %v971 = vpack.c.b16 %v950, %v949
        %v972 = vpack.c.b16 %v952, %v951
        %v973 = vpack.c.b16 %v954, %v953
        %v974 = vpack.c.b16 %v956, %v955
        %v975 = vpack.c.b16 %v958, %v957
        %v976 = vpack.c.b16 %v960, %v959
        %993 = vmatprep.subr.bf16.mxu0 0
        %994 = vmatpush1.bf16.msra.mxu0 %v961
        %995 = vmatprep.subr.bf16.mxu0 0
        %996 = vmatpush1.bf16.msra.mxu0 %v962
        %997 = vmatprep.subr.bf16.mxu0 0
        %998 = vmatpush1.bf16.msra.mxu0 %v963
        %999 = vmatprep.subr.bf16.mxu0 0
        %1000 = vmatpush1.bf16.msra.mxu0 %v964
        %1001 = vmatprep.subr.bf16.mxu0 0
        %1002 = vmatpush1.bf16.msra.mxu0 %v965
        %1003 = vmatprep.subr.bf16.mxu0 0
        %1004 = vmatpush1.bf16.msra.mxu0 %v966
        %1005 = vmatprep.subr.bf16.mxu0 0
        %1006 = vmatpush1.bf16.msra.mxu0 %v967
        %1007 = vmatprep.subr.bf16.mxu0 0
        %1008 = vmatpush1.bf16.msra.mxu0 %v968
        %1009 = vmatprep.subr.bf16.mxu0 0
        %1010 = vmatpush1.bf16.msra.mxu0 %v969
        %1011 = vmatprep.subr.bf16.mxu0 0
        %1012 = vmatpush1.bf16.msra.mxu0 %v970
        %1013 = vmatprep.subr.bf16.mxu0 0
        %1014 = vmatpush1.bf16.msra.mxu0 %v971
        %1015 = vmatprep.subr.bf16.mxu0 0
        %1016 = vmatpush1.bf16.msra.mxu0 %v972
        %1017 = vmatprep.subr.bf16.mxu0 0
        %1018 = vmatpush1.bf16.msra.mxu0 %v973
        %1019 = vmatprep.subr.bf16.mxu0 0
        %1020 = vmatpush1.bf16.msra.mxu0 %v974
        %1021 = vmatprep.subr.bf16.mxu0 0
        %1022 = vmatpush1.bf16.msra.mxu0 %v975
        %1023 = vmatprep.subr.bf16.mxu0 0
        %1024 = vmatpush1.bf16.msra.mxu0 %v976
        %1025 = vmatprep.mubr.bf16.mxu0 %v885
        %1026 = vmatmul.mubr.bf16.gmra.mrb[0].mxu0 %v884
        %v1027 = vpop.f32.mrb[0].mxu0
        %v1028 = vadd.f32 %v895, %v1027
        %v1029 = vpop.f32.mrb[0].mxu0
        %v1030 = vpop.f32.mrb[0].mxu0
        %v1031 = vadd.f32 %v895, %v1030
        %v1032 = vpop.f32.mrb[0].mxu0
        %1033 = vmatprep.mubr.bf16.mxu0 %v887
        %1034 = vmatmul.mubr.bf16.gmra.mrb[0].mxu0 %v886
        %v1035 = vpop.f32.mrb[0].mxu0
        %v1036 = vadd.f32 %v895, %v1035
        %v1037 = vpop.f32.mrb[0].mxu0
        %v1038 = vpop.f32.mrb[0].mxu0
        %v1039 = vadd.f32 %v895, %v1038
        %v1040 = vpop.f32.mrb[0].mxu0
        %1041 = vmatprep.mubr.bf16.mxu0 %v889
        %1042 = vmatmul.mubr.bf16.gmra.mrb[0].mxu0 %v888
        %v1043 = vpop.f32.mrb[0].mxu0
        %v1044 = vadd.f32 %v895, %v1043
        %v1045 = vpop.f32.mrb[0].mxu0
        %v1046 = vpop.f32.mrb[0].mxu0
        %v1047 = vpop.f32.mrb[0].mxu0
        %1048 = vdwg.mxu0
        %vm1049 = vcmask 31744
        %1050 = vst.msk [vmem:[%s340] sm:$0xff] %vm1049, %v1028
        %1051 = vst.msk [vmem:[%s340 + $0x8] sm:$0xff] %vm1049, %v1031
        %1052 = vst.msk [vmem:[%s340 + $0x10] sm:$0xff] %vm1049, %v1036
        %1053 = vst.msk [vmem:[%s340 + $0x18] sm:$0xff] %vm1049, %v1039
        %1054 = vst.msk [vmem:[%s340 + $0x20] sm:$0xff] %vm1049, %v1044
        %s1055 = sand.u32 %s204, 1
        %s1056 = sand.u32 %s204, 1
        %s1057 = smul.addr %s1056, 40
        %s1058 = scalar_lea.vmem [#allocation6], %s1057
        // Predicated region
        $region61: #{tpu_custom_call.1} parent=51 // pred_check
          %p1059 = pneg %p214
        $region62: #{tpu_custom_call.1} parent=51 // pred_check_branch
          %1061 = sbr.rel (%p1059) target = $region64
        $region63: #{tpu_custom_call.1} parent=51 // pred_region
          %s1062 = smul.u32 5, %s23
          %s1063 = ssub.s32 19, %s1062
          %p1064 = scmp.lt.s32.totalorder %s1063, 5
          %s1065 = scalar_select %p1064, %s1063, 5
          %s1066 = smul.u32 128, %s1065
          %p1067 = scmp.ne.s32.totalorder 0, %s1066
          %s1068 = smul.addr %s1062, 8
          %s1069 = scalar_lea.vmem %s8, %s1068
          // Predicated region
          $region65: #{tpu_custom_call.1} parent=63 // pred_check
            %p1070 = pneg %p1067
          $region66: #{tpu_custom_call.1} parent=63 // pred_check_branch
            %1072 = sbr.rel (%p1070) target = $region68
          $region67: #{tpu_custom_call.1} parent=63 // pred_region
            // Predicated region
            $region69: #{tpu_custom_call.1} parent=67 // pred_check
              _
            $region70: #{tpu_custom_call.1} parent=67 // pred_check_branch
              %1074 = sbr.rel (0) target = $region72
            $region71: #{tpu_custom_call.1} parent=67 // pred_region
              // Predicated region
              $region91: #{tpu_custom_call.1} parent=71 // pred_check
                _
              $region92: #{tpu_custom_call.1} parent=71 // pred_check_branch
                %1132 = sbr.rel (0) target = $region94
              $region93: #{tpu_custom_call.1} parent=71 // pred_region
                %s1133 = sdiv.u32.pop %s1065, 5
                %s1134 = srem.u32.pop %s1065, 5
                // While loop
                $region95: #{tpu_custom_call.1} parent=93 // loop_pre_header
                  _
                $region96: #{tpu_custom_call.1} parent=93 // loop_header
                  %s1136 = sphi 0, %s1138
                  %p1137 = scmp.ge.s32.totalorder %s1136, %s1133
                  %s1141 = sphi 0, %s1156
                  %s1142 = sphi %s1058, %s1159
                  %s1143 = sphi %s1069, %s1160
                $region97: #{tpu_custom_call.1} parent=93 // loop_header_branch
                  %1140 = sbr.rel (%p1137) target = $region101
                $region98: #{tpu_custom_call.1} parent=93 // loop_body
                  %v1144 = vld [vmem:[%s1142] sm:$0xff]
                  %1145 = vst [vmem:[%s1143] sm:$0xff] %v1144
                  %v1146 = vld [vmem:[%s1142 + $0x8] sm:$0xff]
                  %1147 = vst [vmem:[%s1143 + $0x8] sm:$0xff] %v1146
                  %v1148 = vld [vmem:[%s1142 + $0x10] sm:$0xff]
                  %1149 = vst [vmem:[%s1143 + $0x10] sm:$0xff] %v1148
                  %v1150 = vld [vmem:[%s1142 + $0x18] sm:$0xff]
                  %1151 = vst [vmem:[%s1143 + $0x18] sm:$0xff] %v1150
                  %v1152 = vld [vmem:[%s1142 + $0x20] sm:$0xff]
                  %1153 = vst [vmem:[%s1143 + $0x20] sm:$0xff] %v1152
                  %s1154 = sadd.s32 1, %s1141
                  %p1155 = scmp.ge.s32.totalorder %s1154, %s1133
                  %s1156 = scalar_select %p1155, 0, %s1154
                  %s1157 = smul.u32 %s1156, 40
                  %s1158 = smul.u32 %s1156, 40
                  %s1159 = scalar_lea.vmem %s1058, %s1157 [#allocation6]
                  %s1160 = scalar_lea.vmem %s1069, %s1158
                $region99: #{tpu_custom_call.1} parent=93 // loop_footer
                  %s1138 = sadd.s32 %s1136, 1
                $region100: #{tpu_custom_call.1} parent=93 // loop_footer_branch
                  %1135 = sbr.rel target = $region96
                $region101: #{tpu_custom_call.1} parent=93 // loop_exit
                  _
                %s1161 = sdiv.u32.pop %s1065, 5
                %s1162 = srem.u32.pop %s1065, 5
                %s1163 = smul.u32 %s1161, 5
                %s1164 = smul.u32 8, %s1163
                %s1165 = scalar_lea.vmem %s1058, %s1164 [#allocation6]
                %s1166 = smul.u32 8, %s1163
                %s1167 = scalar_lea.vmem %s1069, %s1166
                // While loop
                $region102: #{tpu_custom_call.1} parent=93 // loop_pre_header
                  _
                $region103: #{tpu_custom_call.1} parent=93 // loop_header
                  %s1169 = sphi 0, %s1171
                  %p1170 = scmp.ge.s32.totalorder %s1169, %s1162
                  %s1174 = sphi 0, %s1181
                  %s1175 = sphi %s1165, %s1184
                  %s1176 = sphi %s1167, %s1185
                $region104: #{tpu_custom_call.1} parent=93 // loop_header_branch
                  %1173 = sbr.rel (%p1170) target = $region108
                $region105: #{tpu_custom_call.1} parent=93 // loop_body
                  %v1177 = vld [vmem:[%s1175] sm:$0xff]
                  %1178 = vst [vmem:[%s1176] sm:$0xff] %v1177
                  %s1179 = sadd.s32 1, %s1174
                  %p1180 = scmp.ge.s32.totalorder %s1179, %s1162
                  %s1181 = scalar_select %p1180, 0, %s1179
                  %s1182 = smul.u32 %s1181, 8
                  %s1183 = smul.u32 %s1181, 8
                  %s1184 = scalar_lea.vmem %s1165, %s1182 [#allocation6]
                  %s1185 = scalar_lea.vmem %s1167, %s1183
                $region106: #{tpu_custom_call.1} parent=93 // loop_footer
                  %s1171 = sadd.s32 %s1169, 1
                $region107: #{tpu_custom_call.1} parent=93 // loop_footer_branch
                  %1168 = sbr.rel target = $region103
                $region108: #{tpu_custom_call.1} parent=93 // loop_exit
                  _
              $region94: #{tpu_custom_call.1} parent=71 // pred_fallthru
                _
              // Predicated region
              $region109: #{tpu_custom_call.1} parent=71 // pred_check
                _
              $region110: #{tpu_custom_call.1} parent=71 // pred_check_branch
                %1187 = sbr.rel target = $region112
              $region111: #{tpu_custom_call.1} parent=71 // pred_region
                _
              $region112: #{tpu_custom_call.1} parent=71 // pred_fallthru
                _
            $region72: #{tpu_custom_call.1} parent=67 // pred_fallthru
              _
            // Predicated region
            $region73: #{tpu_custom_call.1} parent=67 // pred_check
              _
            $region74: #{tpu_custom_call.1} parent=67 // pred_check_branch
              %1076 = sbr.rel target = $region76
            $region75: #{tpu_custom_call.1} parent=67 // pred_region
              %s1078 = sdiv.u32.pop %s1065, 5
              %s1079 = srem.u32.pop %s1065, 5
              // While loop
              $region77: #{tpu_custom_call.1} parent=75 // loop_pre_header
                _
              $region78: #{tpu_custom_call.1} parent=75 // loop_header
                %s1081 = sphi 0, %s1083
                %p1082 = scmp.ge.s32.totalorder %s1081, %s1078
                %s1086 = sphi 0, %s1101
                %s1087 = sphi %s1058, %s1104
                %s1088 = sphi %s1069, %s1105
              $region79: #{tpu_custom_call.1} parent=75 // loop_header_branch
                %1085 = sbr.rel (%p1082) target = $region83
              $region80: #{tpu_custom_call.1} parent=75 // loop_body
                %v1089 = vld [vmem:[%s1087] sm:$0xff]
                %1090 = vst [vmem:[%s1088] sm:$0xff] %v1089
                %v1091 = vld [vmem:[%s1087 + $0x8] sm:$0xff]
                %1092 = vst [vmem:[%s1088 + $0x8] sm:$0xff] %v1091
                %v1093 = vld [vmem:[%s1087 + $0x10] sm:$0xff]
                %1094 = vst [vmem:[%s1088 + $0x10] sm:$0xff] %v1093
                %v1095 = vld [vmem:[%s1087 + $0x18] sm:$0xff]
                %1096 = vst [vmem:[%s1088 + $0x18] sm:$0xff] %v1095
                %v1097 = vld [vmem:[%s1087 + $0x20] sm:$0xff]
                %1098 = vst [vmem:[%s1088 + $0x20] sm:$0xff] %v1097
                %s1099 = sadd.s32 1, %s1086
                %p1100 = scmp.ge.s32.totalorder %s1099, %s1078
                %s1101 = scalar_select %p1100, 0, %s1099
                %s1102 = smul.u32 %s1101, 40
                %s1103 = smul.u32 %s1101, 40
                %s1104 = scalar_lea.vmem %s1058, %s1102 [#allocation6]
                %s1105 = scalar_lea.vmem %s1069, %s1103
              $region81: #{tpu_custom_call.1} parent=75 // loop_footer
                %s1083 = sadd.s32 %s1081, 1
              $region82: #{tpu_custom_call.1} parent=75 // loop_footer_branch
                %1080 = sbr.rel target = $region78
              $region83: #{tpu_custom_call.1} parent=75 // loop_exit
                _
              %s1106 = sdiv.u32.pop %s1065, 5
              %s1107 = srem.u32.pop %s1065, 5
              %s1108 = smul.u32 %s1106, 5
              %s1109 = smul.u32 8, %s1108
              %s1110 = scalar_lea.vmem %s1058, %s1109 [#allocation6]
              %s1111 = smul.u32 8, %s1108
              %s1112 = scalar_lea.vmem %s1069, %s1111
              // While loop
              $region84: #{tpu_custom_call.1} parent=75 // loop_pre_header
                _
              $region85: #{tpu_custom_call.1} parent=75 // loop_header
                %s1114 = sphi 0, %s1116
                %p1115 = scmp.ge.s32.totalorder %s1114, %s1107
                %s1119 = sphi 0, %s1126
                %s1120 = sphi %s1110, %s1129
                %s1121 = sphi %s1112, %s1130
              $region86: #{tpu_custom_call.1} parent=75 // loop_header_branch
                %1118 = sbr.rel (%p1115) target = $region90
              $region87: #{tpu_custom_call.1} parent=75 // loop_body
                %v1122 = vld [vmem:[%s1120] sm:$0xff]
                %1123 = vst [vmem:[%s1121] sm:$0xff] %v1122
                %s1124 = sadd.s32 1, %s1119
                %p1125 = scmp.ge.s32.totalorder %s1124, %s1107
                %s1126 = scalar_select %p1125, 0, %s1124
                %s1127 = smul.u32 %s1126, 8
                %s1128 = smul.u32 %s1126, 8
                %s1129 = scalar_lea.vmem %s1110, %s1127 [#allocation6]
                %s1130 = scalar_lea.vmem %s1112, %s1128
              $region88: #{tpu_custom_call.1} parent=75 // loop_footer
                %s1116 = sadd.s32 %s1114, 1
              $region89: #{tpu_custom_call.1} parent=75 // loop_footer_branch
                %1113 = sbr.rel target = $region85
              $region90: #{tpu_custom_call.1} parent=75 // loop_exit
                _
            $region76: #{tpu_custom_call.1} parent=67 // pred_fallthru
              _
          $region68: #{tpu_custom_call.1} parent=63 // pred_fallthru
            _
          %1188 = vnop
        $region64: #{tpu_custom_call.1} parent=51 // pred_fallthru
          _
      $region52: #{tpu_custom_call.1} parent=5 // pred_fallthru
        _
      %p1189 = scmp.le.s32.totalorder 2, %s18
      // Predicated region
      $region113: #{tpu_custom_call.1} parent=5 // pred_check
        %p1190 = pneg %p1189
      $region114: #{tpu_custom_call.1} parent=5 // pred_check_branch
        %1192 = sbr.rel (%p1190) target = $region116
      $region115: #{tpu_custom_call.1} parent=5 // pred_region
        %s1193 = ssub.s32 %s18, 2
        // Predicated region
        $region117: #{tpu_custom_call.1} parent=115 // pred_check
          %p1194 = pneg %p220
        $region118: #{tpu_custom_call.1} parent=115 // pred_check_branch
          %1196 = sbr.rel (%p1194) target = $region120
        $region119: #{tpu_custom_call.1} parent=115 // pred_region
          %s1197 = sand.u32 %s205, 1
          %s1198 = sand.u32 %s205, 1
          %s1199 = smul.addr %s1198, 40
          %s1200 = scalar_lea.vmem [#allocation6], %s1199
        $region120: #{tpu_custom_call.1} parent=115 // pred_fallthru
          _
      $region116: #{tpu_custom_call.1} parent=5 // pred_fallthru
        _
    $region6: #{tpu_custom_call.1} parent=1 // loop_footer
      %s22 = sadd.s32 1, %s18
    $region7: #{tpu_custom_call.1} parent=1 // loop_footer_branch
      %17 = sbr.rel target = $region3
    $region8: #{tpu_custom_call.1} parent=1 // loop_exit
      _
    %1201 = vsyncpa [#allocation3], 1
    %s1202 = scalar_lea.sflag [#allocation3], 1
    %1203 = vsyncpa %s1202, 1
    %1204 = vsyncpa [#allocation5], 1

</llo_original>
